<compile_context>
chip_gen: v7x
topology: tpu7x:2x2x1
jax: 0.10.0
libtpu: 0.0.40
codegen_flags: <defaults>
</compile_context>

<pallas_src>
import functools
import math

import jax
import jax.numpy as jnp
from jax.experimental import pallas as pl
from jax.experimental.pallas import tpu as pltpu


def _label_smoothing_kernel(logp_ref, tgt_ref, out_ref, *,
                            smoothing_value, confidence,
                            ignore_index, ignore_col,
                            ent_normal, ent_tgt_is_ignore):
    logp = logp_ref[...].astype(jnp.float32)        # (bt, V) model log-probs
    tgt = tgt_ref[...]                              # (bt, 1) int32

    col = jax.lax.broadcasted_iota(jnp.int32, logp.shape, 1)
    is_tgt = col == tgt

    # logq at each row's target column (compare + select + lane reduce; no gather).
    logq_tgt = jnp.sum(jnp.where(is_tgt, logp, 0.0), axis=-1, keepdims=True)
    # Plain (un-masked) row sum; the ignore column is read back as a static
    # one-lane slice of the ref instead of a second full-width mask+select pass.
    sum_all = jnp.sum(logp, axis=-1, keepdims=True)
    logq_ign = logp_ref[:, ignore_col:ignore_col + 1].astype(jnp.float32)

    tgt_is_ign = tgt == ignore_col
    # Smoothing columns = all columns except the target, and except ignore_col
    # only when it is not itself the target (scatter_ overwrites the zeroed cell).
    sum_smooth = sum_all - logq_tgt - jnp.where(tgt_is_ign, 0.0, logq_ign)

    cross = jnp.float32(smoothing_value) * sum_smooth
    if confidence > 0.0:   # trace-time guard: label_smoothing == 1.0 => p_tgt == 0
        cross = cross + jnp.float32(confidence) * logq_tgt

    # Entropy term sum_j p_j*log(p_j) is a trace-time constant; it differs when
    # the target column coincides with the (wrapped) ignore column.
    ent = jnp.where(tgt_is_ign,
                    jnp.float32(ent_tgt_is_ignore),
                    jnp.float32(ent_normal))
    row_loss = ent - cross

    # masked_fill_: rows whose target equals ignore_index contribute nothing.
    # This also zeroes the undefined rows of a ragged tail block (their padded
    # targets are ignore_index); jnp.where is a true select so garbage can't leak.
    out_ref[...] = jnp.where(tgt == ignore_index, jnp.float32(0.0), row_loss)


def label_smoothing_loss(output, target, *, label_smoothing, tgt_vocab_size,
                         ignore_index=-100, batch_tile=None):
    """output: (B, V) float log-probs (f32 or bf16); target: (B,) int.
    Returns scalar f32 (KL divergence, reduction='sum'), matching the module."""
    assert 0.0 < label_smoothing <= 1.0
    B, V = output.shape
    assert V == tgt_vocab_size
    assert V > 2, "label smoothing needs tgt_vocab_size > 2"

    smoothing_value = label_smoothing / (tgt_vocab_size - 2)
    confidence = 1.0 - label_smoothing
    # torch indexes one_hot[ignore_index]: negative indices wrap.
    ignore_col = ignore_index if ignore_index >= 0 else ignore_index + tgt_vocab_size
    assert 0 <= ignore_col < tgt_vocab_size, "ignore_index out of vocab range"

    # Trace-time entropy constants sum_j p_j*log(p_j).
    c_log_c = confidence * math.log(confidence) if confidence > 0.0 else 0.0
    s_log_s = smoothing_value * math.log(smoothing_value)
    ent_normal = c_log_c + (V - 2) * s_log_s          # target != ignore_col
    ent_tgt_is_ignore = c_log_c + (V - 1) * s_log_s   # target == ignore_col

    # --- tile sizing: aim for ~6 MiB of log-probs per grid step -------------
    itemsize = jnp.dtype(output.dtype).itemsize
    if batch_tile is None:
        target_block_bytes = 6 * 1024 * 1024
        bt = (target_block_bytes // (V * itemsize)) // 16 * 16
        bt = max(16, min(int(bt), 4096))
    else:
        bt = int(batch_tile)
        assert bt > 0 and bt % 16 == 0
    # Don't tile beyond the (16-rounded) batch itself.
    bt = min(bt, -(-B // 16) * 16)
    # TODO(synk): for very large vocabularies (one (16, V) block in the tens of
    # MiB) add a second "arbitrary" grid axis over V, accumulating the three row
    # partial sums in VMEM scratch, instead of shrinking batch_tile.
    # TODO(synk): optionally fuse the upstream log_softmax (take raw logits,
    # compute rowmax + logsumexp in the same pass) to avoid materialising the
    # (B, V) log-prob tensor in HBM at all.

    num_tiles = -(-B // bt)
    B_pad = num_tiles * bt

    # --- pad ONLY the target vector; the (B, V) array is consumed in place ---
    tgt = target.astype(jnp.int32)
    if B_pad != B:
        tgt = jnp.pad(tgt, (0, B_pad - B), constant_values=ignore_index)
    tgt2d = tgt.reshape(B_pad, 1)

    kernel = functools.partial(
        _label_smoothing_kernel,
        smoothing_value=float(smoothing_value),
        confidence=float(confidence),
        ignore_index=int(ignore_index),
        ignore_col=int(ignore_col),
        ent_normal=float(ent_normal),
        ent_tgt_is_ignore=float(ent_tgt_is_ignore),
    )

    row_losses = pl.pallas_call(
        kernel,
        out_shape=jax.ShapeDtypeStruct((B_pad, 1), jnp.float32),
        grid_spec=pltpu.PrefetchScalarGridSpec(
            num_scalar_prefetch=0,
            grid=(num_tiles,),
            in_specs=[
                pl.BlockSpec((bt, V), lambda i: (i, 0)),   # ragged tail block OK
                pl.BlockSpec((bt, 1), lambda i: (i, 0)),
            ],
            out_specs=pl.BlockSpec((bt, 1), lambda i: (i, 0)),
        ),
        compiler_params=pltpu.CompilerParams(
            # TODO(synk): on v7x verify the grid actually shards across the two
            # TensorCores; if not, switch this axis to pltpu.CORE_PARALLEL.
            dimension_semantics=("parallel",),
            vmem_limit_bytes=48 * 1024 * 1024,   # fits v7x (64 MiB) and v5e/v6e
        ),
    )(output, tgt2d)

    # Rows with target == ignore_index (incl. padded tail rows) are exactly 0.
    return jnp.sum(row_losses)


def _reference(output, target, *, label_smoothing, tgt_vocab_size, ignore_index):
    # Pure-JAX reference mirroring the PyTorch module construction literally.
    B, V = output.shape
    smoothing_value = label_smoothing / (tgt_vocab_size - 2)
    confidence = 1.0 - label_smoothing
    one_hot = jnp.full((V,), smoothing_value, jnp.float32).at[ignore_index].set(0.0)
    model_prob = jnp.tile(one_hot[None, :], (B, 1))
    model_prob = model_prob.at[jnp.arange(B), target].set(confidence)
    model_prob = jnp.where((target == ignore_index)[:, None], 0.0, model_prob)
    kl = jnp.where(model_prob > 0,
                   model_prob * (jnp.log(model_prob) - output.astype(jnp.float32)),
                   0.0)
    return jnp.sum(kl)


if __name__ == "__main__":
    B, V = 16, 128
    label_smoothing = 0.1

    key = jax.random.PRNGKey(0)
    k_logits, k_tgt = jax.random.split(key)

    logits = jax.random.normal(k_logits, (B, V), dtype=jnp.float32)
    output = jax.nn.log_softmax(logits, axis=-1)           # model log-probs
    target = jax.random.randint(k_tgt, (B,), 0, V, dtype=jnp.int32)

    # Case 1: non-negative ignore_index (typical OpenNMT pad index); exercise masking.
    ignore_index = 0
    t1 = target.at[3].set(ignore_index).at[7].set(ignore_index)
    loss1 = jax.block_until_ready(
        label_smoothing_loss(output, t1, label_smoothing=label_smoothing,
                             tgt_vocab_size=V, ignore_index=ignore_index))
    ref1 = _reference(output, t1, label_smoothing=label_smoothing,
                      tgt_vocab_size=V, ignore_index=ignore_index)
    assert jnp.allclose(loss1, ref1, rtol=1e-4, atol=1e-4), (loss1, ref1)

    # Case 2: negative ignore_index (-100 wraps to column 28); exercise the
    # target == ignore_col path without triggering masked_fill.
    ignore_index = -100
    ignore_col = ignore_index + V
    t2 = target.at[5].set(ignore_col)
    loss2 = jax.block_until_ready(
        label_smoothing_loss(output, t2, label_smoothing=label_smoothing,
                             tgt_vocab_size=V, ignore_index=ignore_index))
    ref2 = _reference(output, t2, label_smoothing=label_smoothing,
                      tgt_vocab_size=V, ignore_index=ignore_index)
    assert jnp.allclose(loss2, ref2, rtol=1e-4, atol=1e-4), (loss2, ref2)

    # Case 3: ragged batch (B not a multiple of the tile) — exercises the
    # no-pad path (garbage tail rows masked by padded ignore_index targets).
    Br = 13
    loss3 = jax.block_until_ready(
        label_smoothing_loss(output[:Br], t1[:Br], label_smoothing=label_smoothing,
                             tgt_vocab_size=V, ignore_index=0))
    ref3 = _reference(output[:Br], t1[:Br], label_smoothing=label_smoothing,
                      tgt_vocab_size=V, ignore_index=0)
    assert jnp.allclose(loss3, ref3, rtol=1e-4, atol=1e-4), (loss3, ref3)

    # Case 4: bf16 log-probs in HBM (kernel upcasts to f32 internally).
    out_bf16 = output.astype(jnp.bfloat16)
    loss4 = jax.block_until_ready(
        label_smoothing_loss(out_bf16, t1, label_smoothing=label_smoothing,
                             tgt_vocab_size=V, ignore_index=0))
    ref4 = _reference(out_bf16.astype(jnp.float32), t1,
                      label_smoothing=label_smoothing,
                      tgt_vocab_size=V, ignore_index=0)
    assert jnp.allclose(loss4, ref4, rtol=1e-3, atol=1e-2), (loss4, ref4)

    print("KERNEL_OK")
</pallas_src>

<mosaic_0001>
module attributes {stable_mosaic.version = 11 : i64} {
  func.func @_label_smoothing_kernel(%arg0: i32, %arg1: memref<16x128xf32, #tpu.memory_space<vmem>>, %arg2: memref<16x1xi32, #tpu.memory_space<vmem>>, %arg3: memref<16x1xf32, #tpu.memory_space<vmem>>) attributes {dimension_semantics = [#tpu.dimension_semantics<parallel>], iteration_bounds = array<i64: 1>, scalar_prefetch = 0 : i64, scratch_operands = 0 : i64, tpu.core_type = #tpu.core_type<tc>, window_params = [{transform_indices = @transform_0, window_bounds = array<i64: 16, 128>}, {transform_indices = @transform_1, window_bounds = array<i64: 16, 1>}, {transform_indices = @transform_2, window_bounds = array<i64: 16, 1>}]} {
    %c0 = arith.constant 0 : index
    %c0_0 = arith.constant 0 : index
    %0 = vector.load %arg1[%c0, %c0_0] : memref<16x128xf32, #tpu.memory_space<vmem>>, vector<16x128xf32>
    %c0_1 = arith.constant 0 : index
    %c0_2 = arith.constant 0 : index
    %1 = vector.load %arg2[%c0_1, %c0_2] : memref<16x1xi32, #tpu.memory_space<vmem>>, vector<16x1xi32>
    %2 = tpu.iota {dimensions = array<i32: 1>} : vector<16x128xi32>
    %3 = vector.broadcast %1 : vector<16x1xi32> to vector<16x128xi32>
    %4 = arith.cmpi eq, %2, %3 : vector<16x128xi32>
    %cst = arith.constant 0.000000e+00 : f32
    %5 = vector.broadcast %cst : f32 to vector<16x128xf32>
    %6 = arith.select %4, %0, %5 : vector<16x128xi1>, vector<16x128xf32>
    %cst_3 = arith.constant dense<0.000000e+00> : vector<16xf32>
    %7 = vector.multi_reduction <add>, %6, %cst_3 [1] : vector<16x128xf32> to vector<16xf32>
    %8 = vector.shape_cast %7 : vector<16xf32> to vector<16x1xf32>
    %cst_4 = arith.constant dense<0.000000e+00> : vector<16xf32>
    %9 = vector.multi_reduction <add>, %0, %cst_4 [1] : vector<16x128xf32> to vector<16xf32>
    %10 = vector.shape_cast %9 : vector<16xf32> to vector<16x1xf32>
    %c0_5 = arith.constant 0 : index
    %c0_6 = arith.constant 0 : index
    %11 = vector.load %arg1[%c0_5, %c0_6] : memref<16x128xf32, #tpu.memory_space<vmem>>, vector<16x1xf32>
    %c0_i32 = arith.constant 0 : i32
    %12 = vector.broadcast %c0_i32 : i32 to vector<16x1xi32>
    %13 = arith.cmpi eq, %1, %12 : vector<16x1xi32>
    %14 = arith.subf %10, %8 : vector<16x1xf32>
    %cst_7 = arith.constant 0.000000e+00 : f32
    %15 = vector.broadcast %cst_7 : f32 to vector<16x1xf32>
    %16 = arith.select %13, %15, %11 : vector<16x1xi1>, vector<16x1xf32>
    %17 = arith.subf %14, %16 : vector<16x1xf32>
    %cst_8 = arith.constant 7.93650805E-4 : f32
    %18 = vector.broadcast %cst_8 : f32 to vector<16x1xf32>
    %19 = arith.mulf %18, %17 : vector<16x1xf32>
    %cst_9 = arith.constant 0.899999976 : f32
    %20 = vector.broadcast %cst_9 : f32 to vector<16x1xf32>
    %21 = arith.mulf %20, %8 : vector<16x1xf32>
    %22 = arith.addf %19, %21 : vector<16x1xf32>
    %cst_10 = arith.constant -0.81437695 : f32
    %cst_11 = arith.constant -0.808711171 : f32
    %23 = vector.broadcast %cst_10 : f32 to vector<16x1xf32>
    %24 = vector.broadcast %cst_11 : f32 to vector<16x1xf32>
    %25 = arith.select %13, %23, %24 : vector<16x1xi1>, vector<16x1xf32>
    %26 = arith.subf %25, %22 : vector<16x1xf32>
    %c0_i32_12 = arith.constant 0 : i32
    %27 = vector.broadcast %c0_i32_12 : i32 to vector<16x1xi32>
    %28 = arith.cmpi eq, %1, %27 : vector<16x1xi32>
    %cst_13 = arith.constant 0.000000e+00 : f32
    %29 = vector.broadcast %cst_13 : f32 to vector<16x1xf32>
    %30 = arith.select %28, %29, %26 : vector<16x1xi1>, vector<16x1xf32>
    %c0_14 = arith.constant 0 : index
    %c0_15 = arith.constant 0 : index
    %31 = vector.load %arg3[%c0_14, %c0_15] : memref<16x1xf32, #tpu.memory_space<vmem>>, vector<16x1xf32>
    tpu.vector_store %arg3[%c0_14, %c0_15], %30 {strides = array<i32>} : memref<16x1xf32, #tpu.memory_space<vmem>>, vector<16x1xf32>,
    return
  }
  func.func @transform_0(%arg0: i32) -> (i32, i32) {
    %c0_i32 = arith.constant 0 : i32
    %c0_i32_0 = arith.constant 0 : i32
    return %arg0, %c0_i32 : i32, i32
  }
  func.func @transform_1(%arg0: i32) -> (i32, i32) {
    %c0_i32 = arith.constant 0 : i32
    %c0_i32_0 = arith.constant 0 : i32
    return %arg0, %c0_i32 : i32, i32
  }
  func.func @transform_2(%arg0: i32) -> (i32, i32) {
    %c0_i32 = arith.constant 0 : i32
    %c0_i32_0 = arith.constant 0 : i32
    return %arg0, %c0_i32 : i32, i32
  }
}

</mosaic_0001>

<llo_original>
// kernel: tpu_custom_call.1
$region0: #{tpu_custom_call.1}
  #allocation0 [shape = 'u32[]', space=smem, size = 0x4, offset = 0x4, fixed_abs, tag = 'smem constant byte address 0x4 - core index']
  #allocation1 [shape = 'u32[144,128]{1,0:T(1,128)}', space=vmem, size = 0x12000, scoped, tag = 'internal scratch']
  %s0 = inlined_call_operand.vmem [shape: f32[16,128], index: 0, kind: input, shape index: {}]
  %s1 = inlined_call_operand.vmem [shape: s32[16,1], index: 1, kind: input, shape index: {}]
  %s2 = inlined_call_operand.vmem [shape: f32[16,1], index: 2, kind: output, shape index: {}]
  %s3 = sld [smem:[#allocation0]]
  $region18: #{tpu_custom_call.1} parent=0
    _
  %s5 = ssub.s32 1, %s3
  %s6 = scalar_select 0, %s5, %s3
  // Predicated region
  $region2: #{tpu_custom_call.1} parent=0 // pred_check
    _
  $region3: #{tpu_custom_call.1} parent=0 // pred_check_branch
    %8 = sbr.rel (0) target = $region5
  $region4: #{tpu_custom_call.1} parent=0 // pred_region
    _
  $region5: #{tpu_custom_call.1} parent=0 // pred_fallthru
    _
  // Predicated region
  $region6: #{tpu_custom_call.1} parent=0 // pred_check
    _
  $region7: #{tpu_custom_call.1} parent=0 // pred_check_branch
    %10 = sbr.rel (0) target = $region9
  $region8: #{tpu_custom_call.1} parent=0 // pred_region
    _
  $region9: #{tpu_custom_call.1} parent=0 // pred_fallthru
    _
  %v11 = vld [vmem:[%s0] sm:$0xff]
  %v12 = vld [vmem:[%s0 + $0x8] sm:$0xff]
  %v13 = vld [vmem:[%s1] sm:$0xff]
  %v14 = vld [vmem:[%s1 + $0x8] sm:$0xff]
  %v15 = vlaneseq
  %v16 = vand.u32 %v15, 127
  %17 = vset.pattern.permute.xlu0 0
  %18 = vperm.xlu0 %17, %v13
  %v19 = vpop.permute.xlu0 %18
  %20 = vset.pattern.permute.xlu0 0
  %21 = vperm.xlu0 %20, %v14
  %v22 = vpop.permute.xlu0 %21
  %vm23 = vcmp.eq.s32.totalorder %v16, %v19
  %vm24 = vcmp.eq.s32.totalorder %v16, %v22
  %v25 = vsel %vm23, %v11, 0.0
  %v26 = vsel %vm24, %v12, 0.0
  %27 = vadd.xlane.f32.xlu0 %v25
  %v28 = vpop.xlane.xlu0 %27
  %29 = vadd.xlane.f32.xlu0 %v26
  %v30 = vpop.xlane.xlu0 %29
  %31 = vadd.xlane.f32.xlu0 %v11
  %v32 = vpop.xlane.xlu0 %31
  %33 = vadd.xlane.f32.xlu0 %v12
  %v34 = vpop.xlane.xlu0 %33
  %vm35 = vcmp.eq.s32.totalorder %v13, 0
  %vm36 = vcmp.eq.s32.totalorder %v14, 0
  %v37 = vsub.f32 %v32, %v28
  %v38 = vsub.f32 %v34, %v30
  %v39 = vsel %vm35, 0.0, %v11
  %v40 = vsel %vm36, 0.0, %v12
  %v41 = vsub.f32 %v37, %v39
  %v42 = vsub.f32 %v38, %v40
  %v43 = vmul.f32 %v41, 0.0007936508
  %v44 = vmul.f32 %v42, 0.0007936508
  %v45 = vmul.f32 %v28, 0.9
  %v46 = vmul.f32 %v30, 0.9
  %v47 = vadd.f32 %v43, %v45
  %v48 = vadd.f32 %v44, %v46
  %v49 = vsel %vm35, -0.81437695, -0.8087112
  %v50 = vsel %vm36, -0.81437695, -0.8087112
  %v51 = vsub.f32 %v49, %v47
  %v52 = vsub.f32 %v50, %v48
  %v53 = vsel %vm35, 0.0, %v51
  %v54 = vsel %vm36, 0.0, %v52
  %vm55 = vcmask 7168
  %56 = vst.msk [vmem:[%s2] sm:$0xff] %vm55, %v53
  %57 = vst.msk [vmem:[%s2 + $0x8] sm:$0xff] %vm55, %v54
  // Predicated region
  $region10: #{tpu_custom_call.1} parent=0 // pred_check
    _
  $region11: #{tpu_custom_call.1} parent=0 // pred_check_branch
    %59 = sbr.rel (0) target = $region13
  $region12: #{tpu_custom_call.1} parent=0 // pred_region
    _
  $region13: #{tpu_custom_call.1} parent=0 // pred_fallthru
    _
  // Predicated region
  $region14: #{tpu_custom_call.1} parent=0 // pred_check
    _
  $region15: #{tpu_custom_call.1} parent=0 // pred_check_branch
    %61 = sbr.rel (0) target = $region17
  $region16: #{tpu_custom_call.1} parent=0 // pred_region
    _
  $region17: #{tpu_custom_call.1} parent=0 // pred_fallthru
    _

</llo_original>
